<compile_context>
chip_gen: v5e
topology: v5e:2x2
jax: 0.10.0
libtpu: 0.0.40
codegen_flags: <defaults>
</compile_context>

<pallas_src>
import functools

import jax
import jax.numpy as jnp
from jax.experimental import pallas as pl
from jax.experimental.pallas import tpu as pltpu

PAD = 128          # lane width hidden/output layers are padded to
TB_MAX = 512       # max batch tile (>= 512 rows ~ HBM roofline per tile sweep)


def _round_up(n, m):
    return ((n + m - 1) // m) * m


def mlp_kernel(x_ref,
               w1_ref, b1_ref,
               w2_ref, b2_ref,
               w3_ref, b3_ref,
               w6_ref, b6_ref,
               w7_ref, b7_ref,
               wo_ref, bo_ref,
               out_ref):
    """Fused forward pass for one (tb, in_feats) batch tile.

    All weights/biases are 128-lane padded, so every jnp.dot is a dense MXU
    push and the final store is an unmasked full-lane vst. dropout(p=0) in
    eval mode is the identity and is elided.
    """
    h = x_ref[...]  # (tb, in_feats) f32

    def dense_relu(h, w_ref, b_ref):
        y = jnp.dot(h, w_ref[...], preferred_element_type=jnp.float32)
        return jnp.maximum(y + b_ref[...], 0.0)  # (1, 128) bias broadcasts

    h = dense_relu(h, w1_ref, b1_ref)
    h = dense_relu(h, w2_ref, b2_ref)
    h = dense_relu(h, w3_ref, b3_ref)
    # dropout(p=0) / eval mode -> identity
    h = dense_relu(h, w6_ref, b6_ref)
    h = dense_relu(h, w7_ref, b7_ref)

    out = jnp.dot(h, wo_ref[...], preferred_element_type=jnp.float32)
    out_ref[...] = (out + bo_ref[...]).astype(out_ref.dtype)


def _pad_params(params):
    """Zero-pad every (W, b): W -> (in_or_PAD, PAD), b -> (1, PAD).

    The first layer keeps its true input width (its rows multiply the
    unpadded x block); all output widths go to PAD lanes.
    """
    padded = []
    for idx, (w, b) in enumerate(params):
        fi, fo = w.shape
        rows = fi if idx == 0 else PAD
        wp = jnp.zeros((rows, PAD), jnp.float32).at[:fi, :fo].set(w)
        bp = jnp.zeros((1, PAD), jnp.float32).at[0, :fo].set(b)
        padded.extend([wp, bp])
    return padded


@functools.partial(jax.jit, static_argnames=())
def mlp_forward(x, params):
    """x: (B, input_size) f32. params: list of (W, b), W is (in, out)."""
    B, in_feats = x.shape
    nb_classes = params[-1][0].shape[1]

    # ---- batch tiling: pad B (rows only) so the grid divides evenly -------
    B_pad = max(_round_up(B, 8), 8)
    tb = min(TB_MAX, B_pad)
    B_pad = _round_up(B_pad, tb)
    grid = (B_pad // tb,)

    x_p = x if B_pad == B else jnp.zeros((B_pad, in_feats), jnp.float32).at[:B].set(x)
    flat_params = _pad_params(params)

    # ---- specs: x/out stream over the batch grid, weights stay resident ---
    # x block last dim == full array dim (in_feats) -> legal, lane traffic
    # stays at the true input width instead of a 128-lane padded copy.
    in_specs = [pl.BlockSpec((tb, in_feats), lambda i: (i, 0))]
    for a in flat_params:
        in_specs.append(pl.BlockSpec(a.shape, lambda i: (0, 0)))
    out_spec = pl.BlockSpec((tb, PAD), lambda i: (i, 0))
    out_shape = jax.ShapeDtypeStruct((B_pad, PAD), jnp.float32)

    # ---- VMEM budget: resident weights + double-buffered tiles + headroom -
    weight_bytes = sum(int(a.size) * 4 for a in flat_params)
    x_tile_bytes = tb * in_feats * 4
    out_tile_bytes = tb * PAD * 4
    act_bytes = 6 * tb * PAD * 4           # live intermediate activations
    vmem_bytes = (weight_bytes
                  + 2 * x_tile_bytes
                  + 2 * out_tile_bytes
                  + act_bytes
                  + (8 << 20))             # headroom
    vmem_bytes = int(min(max(vmem_bytes, 16 << 20), 64 << 20))

    out_p = pl.pallas_call(
        mlp_kernel,
        out_shape=out_shape,
        grid=grid,
        in_specs=in_specs,
        out_specs=out_spec,
        compiler_params=pltpu.CompilerParams(
            dimension_semantics=("parallel",),  # megacore sharding on v7x
            vmem_limit_bytes=vmem_bytes,
        ),
    )(x_p, *flat_params)

    # slice away batch + lane padding
    return out_p[:B, :nb_classes]


def init_linear(key, fan_in, fan_out):
    """Deterministic PyTorch-style nn.Linear init: U(-1/sqrt(fan_in), +)."""
    kw, kb = jax.random.split(key)
    bound = 1.0 / (fan_in ** 0.5)
    w = jax.random.uniform(kw, (fan_in, fan_out), jnp.float32, -bound, bound)
    b = jax.random.uniform(kb, (fan_out,), jnp.float32, -bound, bound)
    return w, b


def make_params(key, input_size, nb_classes):
    dims = [input_size, 16, 32, 64, 32, 16, nb_classes]
    params = []
    for i in range(len(dims) - 1):
        key, sub = jax.random.split(key)
        params.append(init_linear(sub, dims[i], dims[i + 1]))
    return params


def reference_forward(x, params):
    """Plain-JAX reference for numerical sanity check."""
    h = x
    for (w, b) in params[:-1]:
        h = jnp.maximum(h @ w + b, 0.0)
    w, b = params[-1]
    return h @ w + b


if __name__ == "__main__":
    key = jax.random.PRNGKey(0)
    k_x, k_p = jax.random.split(key)

    batch = 8
    input_size = 8
    nb_classes = 4

    x = jax.random.normal(k_x, (batch, input_size), jnp.float32)
    params = make_params(k_p, input_size, nb_classes)

    out = mlp_forward(x, params)
    out = jax.block_until_ready(out)

    ref = reference_forward(x, params)
    assert out.shape == (batch, nb_classes), out.shape
    assert jnp.allclose(out, ref, atol=1e-4, rtol=1e-4), "mismatch vs reference"

    print("KERNEL_OK")
</pallas_src>

<mosaic_0001>
module attributes {stable_mosaic.version = 11 : i64} {
  func.func @mlp_kernel(%arg0: i32, %arg1: memref<8x8xf32, #tpu.memory_space<vmem>>, %arg2: memref<8x128xf32, #tpu.memory_space<vmem>>, %arg3: memref<1x128xf32, #tpu.memory_space<vmem>>, %arg4: memref<128x128xf32, #tpu.memory_space<vmem>>, %arg5: memref<1x128xf32, #tpu.memory_space<vmem>>, %arg6: memref<128x128xf32, #tpu.memory_space<vmem>>, %arg7: memref<1x128xf32, #tpu.memory_space<vmem>>, %arg8: memref<128x128xf32, #tpu.memory_space<vmem>>, %arg9: memref<1x128xf32, #tpu.memory_space<vmem>>, %arg10: memref<128x128xf32, #tpu.memory_space<vmem>>, %arg11: memref<1x128xf32, #tpu.memory_space<vmem>>, %arg12: memref<128x128xf32, #tpu.memory_space<vmem>>, %arg13: memref<1x128xf32, #tpu.memory_space<vmem>>, %arg14: memref<8x128xf32, #tpu.memory_space<vmem>>) attributes {dimension_semantics = [#tpu.dimension_semantics<parallel>], iteration_bounds = array<i64: 1>, scalar_prefetch = 0 : i64, scratch_operands = 0 : i64, tpu.core_type = #tpu.core_type<tc>, window_params = [{transform_indices = @transform_0, window_bounds = array<i64: 8, 8>}, {pipeline_mode = #tpu.pipeline_mode<synchronous>, transform_indices = @transform_1, window_bounds = array<i64: 8, 128>}, {pipeline_mode = #tpu.pipeline_mode<synchronous>, transform_indices = @transform_2, window_bounds = array<i64: 1, 128>}, {pipeline_mode = #tpu.pipeline_mode<synchronous>, transform_indices = @transform_3, window_bounds = array<i64: 128, 128>}, {pipeline_mode = #tpu.pipeline_mode<synchronous>, transform_indices = @transform_4, window_bounds = array<i64: 1, 128>}, {pipeline_mode = #tpu.pipeline_mode<synchronous>, transform_indices = @transform_5, window_bounds = array<i64: 128, 128>}, {pipeline_mode = #tpu.pipeline_mode<synchronous>, transform_indices = @transform_6, window_bounds = array<i64: 1, 128>}, {pipeline_mode = #tpu.pipeline_mode<synchronous>, transform_indices = @transform_7, window_bounds = array<i64: 128, 128>}, {pipeline_mode = #tpu.pipeline_mode<synchronous>, transform_indices = @transform_8, window_bounds = array<i64: 1, 128>}, {pipeline_mode = #tpu.pipeline_mode<synchronous>, transform_indices = @transform_9, window_bounds = array<i64: 128, 128>}, {pipeline_mode = #tpu.pipeline_mode<synchronous>, transform_indices = @transform_10, window_bounds = array<i64: 1, 128>}, {pipeline_mode = #tpu.pipeline_mode<synchronous>, transform_indices = @transform_11, window_bounds = array<i64: 128, 128>}, {pipeline_mode = #tpu.pipeline_mode<synchronous>, transform_indices = @transform_12, window_bounds = array<i64: 1, 128>}, {transform_indices = @transform_13, window_bounds = array<i64: 8, 128>}]} {
    %c0 = arith.constant 0 : index
    %c0_0 = arith.constant 0 : index
    %0 = vector.load %arg1[%c0, %c0_0] : memref<8x8xf32, #tpu.memory_space<vmem>>, vector<8x8xf32>
    %c0_1 = arith.constant 0 : index
    %c0_2 = arith.constant 0 : index
    %1 = vector.load %arg2[%c0_1, %c0_2] : memref<8x128xf32, #tpu.memory_space<vmem>>, vector<8x128xf32>
    %cst = arith.constant dense<0.000000e+00> : vector<8x128xf32>
    %2 = tpu.matmul %0, %1, %cst {dimension_numbers = #tpu.dot_dimension_numbers<[1], [0], [0], [1], [0, 0, 1, 1], [], []>} : vector<8x8xf32>, vector<8x128xf32>, vector<8x128xf32> -> vector<8x128xf32>
    %c0_3 = arith.constant 0 : index
    %c0_4 = arith.constant 0 : index
    %3 = vector.load %arg3[%c0_3, %c0_4] : memref<1x128xf32, #tpu.memory_space<vmem>>, vector<1x128xf32>
    %4 = vector.broadcast %3 : vector<1x128xf32> to vector<8x128xf32>
    %5 = arith.addf %2, %4 : vector<8x128xf32>
    %cst_5 = arith.constant 0.000000e+00 : f32
    %6 = vector.broadcast %cst_5 : f32 to vector<8x128xf32>
    %7 = arith.maximumf %5, %6 : vector<8x128xf32>
    %c0_6 = arith.constant 0 : index
    %c0_7 = arith.constant 0 : index
    %8 = vector.load %arg4[%c0_6, %c0_7] : memref<128x128xf32, #tpu.memory_space<vmem>>, vector<128x128xf32>
    %cst_8 = arith.constant dense<0.000000e+00> : vector<8x128xf32>
    %9 = tpu.matmul %7, %8, %cst_8 {dimension_numbers = #tpu.dot_dimension_numbers<[1], [0], [0], [1], [0, 0, 1, 1], [], []>} : vector<8x128xf32>, vector<128x128xf32>, vector<8x128xf32> -> vector<8x128xf32>
    %c0_9 = arith.constant 0 : index
    %c0_10 = arith.constant 0 : index
    %10 = vector.load %arg5[%c0_9, %c0_10] : memref<1x128xf32, #tpu.memory_space<vmem>>, vector<1x128xf32>
    %11 = vector.broadcast %10 : vector<1x128xf32> to vector<8x128xf32>
    %12 = arith.addf %9, %11 : vector<8x128xf32>
    %cst_11 = arith.constant 0.000000e+00 : f32
    %13 = vector.broadcast %cst_11 : f32 to vector<8x128xf32>
    %14 = arith.maximumf %12, %13 : vector<8x128xf32>
    %c0_12 = arith.constant 0 : index
    %c0_13 = arith.constant 0 : index
    %15 = vector.load %arg6[%c0_12, %c0_13] : memref<128x128xf32, #tpu.memory_space<vmem>>, vector<128x128xf32>
    %cst_14 = arith.constant dense<0.000000e+00> : vector<8x128xf32>
    %16 = tpu.matmul %14, %15, %cst_14 {dimension_numbers = #tpu.dot_dimension_numbers<[1], [0], [0], [1], [0, 0, 1, 1], [], []>} : vector<8x128xf32>, vector<128x128xf32>, vector<8x128xf32> -> vector<8x128xf32>
    %c0_15 = arith.constant 0 : index
    %c0_16 = arith.constant 0 : index
    %17 = vector.load %arg7[%c0_15, %c0_16] : memref<1x128xf32, #tpu.memory_space<vmem>>, vector<1x128xf32>
    %18 = vector.broadcast %17 : vector<1x128xf32> to vector<8x128xf32>
    %19 = arith.addf %16, %18 : vector<8x128xf32>
    %cst_17 = arith.constant 0.000000e+00 : f32
    %20 = vector.broadcast %cst_17 : f32 to vector<8x128xf32>
    %21 = arith.maximumf %19, %20 : vector<8x128xf32>
    %c0_18 = arith.constant 0 : index
    %c0_19 = arith.constant 0 : index
    %22 = vector.load %arg8[%c0_18, %c0_19] : memref<128x128xf32, #tpu.memory_space<vmem>>, vector<128x128xf32>
    %cst_20 = arith.constant dense<0.000000e+00> : vector<8x128xf32>
    %23 = tpu.matmul %21, %22, %cst_20 {dimension_numbers = #tpu.dot_dimension_numbers<[1], [0], [0], [1], [0, 0, 1, 1], [], []>} : vector<8x128xf32>, vector<128x128xf32>, vector<8x128xf32> -> vector<8x128xf32>
    %c0_21 = arith.constant 0 : index
    %c0_22 = arith.constant 0 : index
    %24 = vector.load %arg9[%c0_21, %c0_22] : memref<1x128xf32, #tpu.memory_space<vmem>>, vector<1x128xf32>
    %25 = vector.broadcast %24 : vector<1x128xf32> to vector<8x128xf32>
    %26 = arith.addf %23, %25 : vector<8x128xf32>
    %cst_23 = arith.constant 0.000000e+00 : f32
    %27 = vector.broadcast %cst_23 : f32 to vector<8x128xf32>
    %28 = arith.maximumf %26, %27 : vector<8x128xf32>
    %c0_24 = arith.constant 0 : index
    %c0_25 = arith.constant 0 : index
    %29 = vector.load %arg10[%c0_24, %c0_25] : memref<128x128xf32, #tpu.memory_space<vmem>>, vector<128x128xf32>
    %cst_26 = arith.constant dense<0.000000e+00> : vector<8x128xf32>
    %30 = tpu.matmul %28, %29, %cst_26 {dimension_numbers = #tpu.dot_dimension_numbers<[1], [0], [0], [1], [0, 0, 1, 1], [], []>} : vector<8x128xf32>, vector<128x128xf32>, vector<8x128xf32> -> vector<8x128xf32>
    %c0_27 = arith.constant 0 : index
    %c0_28 = arith.constant 0 : index
    %31 = vector.load %arg11[%c0_27, %c0_28] : memref<1x128xf32, #tpu.memory_space<vmem>>, vector<1x128xf32>
    %32 = vector.broadcast %31 : vector<1x128xf32> to vector<8x128xf32>
    %33 = arith.addf %30, %32 : vector<8x128xf32>
    %cst_29 = arith.constant 0.000000e+00 : f32
    %34 = vector.broadcast %cst_29 : f32 to vector<8x128xf32>
    %35 = arith.maximumf %33, %34 : vector<8x128xf32>
    %c0_30 = arith.constant 0 : index
    %c0_31 = arith.constant 0 : index
    %36 = vector.load %arg12[%c0_30, %c0_31] : memref<128x128xf32, #tpu.memory_space<vmem>>, vector<128x128xf32>
    %cst_32 = arith.constant dense<0.000000e+00> : vector<8x128xf32>
    %37 = tpu.matmul %35, %36, %cst_32 {dimension_numbers = #tpu.dot_dimension_numbers<[1], [0], [0], [1], [0, 0, 1, 1], [], []>} : vector<8x128xf32>, vector<128x128xf32>, vector<8x128xf32> -> vector<8x128xf32>
    %c0_33 = arith.constant 0 : index
    %c0_34 = arith.constant 0 : index
    %38 = vector.load %arg13[%c0_33, %c0_34] : memref<1x128xf32, #tpu.memory_space<vmem>>, vector<1x128xf32>
    %39 = vector.broadcast %38 : vector<1x128xf32> to vector<8x128xf32>
    %40 = arith.addf %37, %39 : vector<8x128xf32>
    %c0_35 = arith.constant 0 : index
    %c0_36 = arith.constant 0 : index
    %41 = vector.load %arg14[%c0_35, %c0_36] : memref<8x128xf32, #tpu.memory_space<vmem>>, vector<8x128xf32>
    tpu.vector_store %arg14[%c0_35, %c0_36], %40 {strides = array<i32>} : memref<8x128xf32, #tpu.memory_space<vmem>>, vector<8x128xf32>,
    return
  }
  func.func @transform_0(%arg0: i32) -> (i32, i32) {
    %c0_i32 = arith.constant 0 : i32
    %c0_i32_0 = arith.constant 0 : i32
    return %arg0, %c0_i32 : i32, i32
  }
  func.func @transform_1(%arg0: i32) -> (i32, i32) {
    %c0_i32 = arith.constant 0 : i32
    %c0_i32_0 = arith.constant 0 : i32
    %c0_i32_1 = arith.constant 0 : i32
    return %c0_i32, %c0_i32_0 : i32, i32
  }
  func.func @transform_2(%arg0: i32) -> (i32, i32) {
    %c0_i32 = arith.constant 0 : i32
    %c0_i32_0 = arith.constant 0 : i32
    %c0_i32_1 = arith.constant 0 : i32
    return %c0_i32, %c0_i32_0 : i32, i32
  }
  func.func @transform_3(%arg0: i32) -> (i32, i32) {
    %c0_i32 = arith.constant 0 : i32
    %c0_i32_0 = arith.constant 0 : i32
    %c0_i32_1 = arith.constant 0 : i32
    return %c0_i32, %c0_i32_0 : i32, i32
  }
  func.func @transform_4(%arg0: i32) -> (i32, i32) {
    %c0_i32 = arith.constant 0 : i32
    %c0_i32_0 = arith.constant 0 : i32
    %c0_i32_1 = arith.constant 0 : i32
    return %c0_i32, %c0_i32_0 : i32, i32
  }
  func.func @transform_5(%arg0: i32) -> (i32, i32) {
    %c0_i32 = arith.constant 0 : i32
    %c0_i32_0 = arith.constant 0 : i32
    %c0_i32_1 = arith.constant 0 : i32
    return %c0_i32, %c0_i32_0 : i32, i32
  }
  func.func @transform_6(%arg0: i32) -> (i32, i32) {
    %c0_i32 = arith.constant 0 : i32
    %c0_i32_0 = arith.constant 0 : i32
    %c0_i32_1 = arith.constant 0 : i32
    return %c0_i32, %c0_i32_0 : i32, i32
  }
  func.func @transform_7(%arg0: i32) -> (i32, i32) {
    %c0_i32 = arith.constant 0 : i32
    %c0_i32_0 = arith.constant 0 : i32
    %c0_i32_1 = arith.constant 0 : i32
    return %c0_i32, %c0_i32_0 : i32, i32
  }
  func.func @transform_8(%arg0: i32) -> (i32, i32) {
    %c0_i32 = arith.constant 0 : i32
    %c0_i32_0 = arith.constant 0 : i32
    %c0_i32_1 = arith.constant 0 : i32
    return %c0_i32, %c0_i32_0 : i32, i32
  }
  func.func @transform_9(%arg0: i32) -> (i32, i32) {
    %c0_i32 = arith.constant 0 : i32
    %c0_i32_0 = arith.constant 0 : i32
    %c0_i32_1 = arith.constant 0 : i32
    return %c0_i32, %c0_i32_0 : i32, i32
  }
  func.func @transform_10(%arg0: i32) -> (i32, i32) {
    %c0_i32 = arith.constant 0 : i32
    %c0_i32_0 = arith.constant 0 : i32
    %c0_i32_1 = arith.constant 0 : i32
    return %c0_i32, %c0_i32_0 : i32, i32
  }
  func.func @transform_11(%arg0: i32) -> (i32, i32) {
    %c0_i32 = arith.constant 0 : i32
    %c0_i32_0 = arith.constant 0 : i32
    %c0_i32_1 = arith.constant 0 : i32
    return %c0_i32, %c0_i32_0 : i32, i32
  }
  func.func @transform_12(%arg0: i32) -> (i32, i32) {
    %c0_i32 = arith.constant 0 : i32
    %c0_i32_0 = arith.constant 0 : i32
    %c0_i32_1 = arith.constant 0 : i32
    return %c0_i32, %c0_i32_0 : i32, i32
  }
  func.func @transform_13(%arg0: i32) -> (i32, i32) {
    %c0_i32 = arith.constant 0 : i32
    %c0_i32_0 = arith.constant 0 : i32
    return %arg0, %c0_i32 : i32, i32
  }
}

</mosaic_0001>

<llo_original>
// kernel: mlp_forward.1
$region0: #{mlp_forward.1}
  #allocation0 [shape = 'u32[]', space=smem, size = 0x4, offset = 0x4, fixed_abs, tag = 'smem constant byte address 0x4 - core index']
  #allocation1 [shape = 'u32[72,128]{1,0:T(1,128)}', space=vmem, size = 0x9000, scoped, tag = 'internal scratch']
  %s0 = inlined_call_operand.vmem [shape: f32[8,8], index: 0, kind: input, shape index: {}]
  %s1 = inlined_call_operand.vmem [shape: f32[8,128], index: 1, kind: input, shape index: {}]
  %s2 = inlined_call_operand.vmem [shape: f32[1,128], index: 2, kind: input, shape index: {}]
  %s3 = inlined_call_operand.vmem [shape: f32[128,128], index: 3, kind: input, shape index: {}]
  %s4 = inlined_call_operand.vmem [shape: f32[1,128], index: 4, kind: input, shape index: {}]
  %s5 = inlined_call_operand.vmem [shape: f32[128,128], index: 5, kind: input, shape index: {}]
  %s6 = inlined_call_operand.vmem [shape: f32[1,128], index: 6, kind: input, shape index: {}]
  %s7 = inlined_call_operand.vmem [shape: f32[128,128], index: 7, kind: input, shape index: {}]
  %s8 = inlined_call_operand.vmem [shape: f32[1,128], index: 8, kind: input, shape index: {}]
  %s9 = inlined_call_operand.vmem [shape: f32[128,128], index: 9, kind: input, shape index: {}]
  %s10 = inlined_call_operand.vmem [shape: f32[1,128], index: 10, kind: input, shape index: {}]
  %s11 = inlined_call_operand.vmem [shape: f32[128,128], index: 11, kind: input, shape index: {}]
  %s12 = inlined_call_operand.vmem [shape: f32[1,128], index: 12, kind: input, shape index: {}]
  %s13 = inlined_call_operand.vmem [shape: f32[8,128], index: 13, kind: output, shape index: {}]
  %s14 = sld [smem:[#allocation0]]
  $region62: #{mlp_forward.1} parent=0
    _
  %s16 = ssub.s32 1, %s14
  %s17 = scalar_select 0, %s16, %s14
  // Predicated region
  $region2: #{mlp_forward.1} parent=0 // pred_check
    _
  $region3: #{mlp_forward.1} parent=0 // pred_check_branch
    %19 = sbr.rel (0) target = $region5
  $region4: #{mlp_forward.1} parent=0 // pred_region
    _
  $region5: #{mlp_forward.1} parent=0 // pred_fallthru
    _
  // Predicated region
  $region6: #{mlp_forward.1} parent=0 // pred_check
    _
  $region7: #{mlp_forward.1} parent=0 // pred_check_branch
    %21 = sbr.rel (0) target = $region9
  $region8: #{mlp_forward.1} parent=0 // pred_region
    _
  $region9: #{mlp_forward.1} parent=0 // pred_fallthru
    _
  // Predicated region
  $region10: #{mlp_forward.1} parent=0 // pred_check
    _
  $region11: #{mlp_forward.1} parent=0 // pred_check_branch
    %23 = sbr.rel (0) target = $region13
  $region12: #{mlp_forward.1} parent=0 // pred_region
    _
  $region13: #{mlp_forward.1} parent=0 // pred_fallthru
    _
  // Predicated region
  $region14: #{mlp_forward.1} parent=0 // pred_check
    _
  $region15: #{mlp_forward.1} parent=0 // pred_check_branch
    %25 = sbr.rel (0) target = $region17
  $region16: #{mlp_forward.1} parent=0 // pred_region
    _
  $region17: #{mlp_forward.1} parent=0 // pred_fallthru
    _
  // Predicated region
  $region18: #{mlp_forward.1} parent=0 // pred_check
    _
  $region19: #{mlp_forward.1} parent=0 // pred_check_branch
    %27 = sbr.rel (0) target = $region21
  $region20: #{mlp_forward.1} parent=0 // pred_region
    _
  $region21: #{mlp_forward.1} parent=0 // pred_fallthru
    _
  // Predicated region
  $region22: #{mlp_forward.1} parent=0 // pred_check
    _
  $region23: #{mlp_forward.1} parent=0 // pred_check_branch
    %29 = sbr.rel (0) target = $region25
  $region24: #{mlp_forward.1} parent=0 // pred_region
    _
  $region25: #{mlp_forward.1} parent=0 // pred_fallthru
    _
  // Predicated region
  $region26: #{mlp_forward.1} parent=0 // pred_check
    _
  $region27: #{mlp_forward.1} parent=0 // pred_check_branch
    %31 = sbr.rel (0) target = $region29
  $region28: #{mlp_forward.1} parent=0 // pred_region
    _
  $region29: #{mlp_forward.1} parent=0 // pred_fallthru
    _
  // Predicated region
  $region30: #{mlp_forward.1} parent=0 // pred_check
    _
  $region31: #{mlp_forward.1} parent=0 // pred_check_branch
    %33 = sbr.rel (0) target = $region33
  $region32: #{mlp_forward.1} parent=0 // pred_region
    _
  $region33: #{mlp_forward.1} parent=0 // pred_fallthru
    _
  // Predicated region
  $region34: #{mlp_forward.1} parent=0 // pred_check
    _
  $region35: #{mlp_forward.1} parent=0 // pred_check_branch
    %35 = sbr.rel (0) target = $region37
  $region36: #{mlp_forward.1} parent=0 // pred_region
    _
  $region37: #{mlp_forward.1} parent=0 // pred_fallthru
    _
  // Predicated region
  $region38: #{mlp_forward.1} parent=0 // pred_check
    _
  $region39: #{mlp_forward.1} parent=0 // pred_check_branch
    %37 = sbr.rel (0) target = $region41
  $region40: #{mlp_forward.1} parent=0 // pred_region
    _
  $region41: #{mlp_forward.1} parent=0 // pred_fallthru
    _
  // Predicated region
  $region42: #{mlp_forward.1} parent=0 // pred_check
    _
  $region43: #{mlp_forward.1} parent=0 // pred_check_branch
    %39 = sbr.rel (0) target = $region45
  $region44: #{mlp_forward.1} parent=0 // pred_region
    _
  $region45: #{mlp_forward.1} parent=0 // pred_fallthru
    _
  // Predicated region
  $region46: #{mlp_forward.1} parent=0 // pred_check
    _
  $region47: #{mlp_forward.1} parent=0 // pred_check_branch
    %41 = sbr.rel (0) target = $region49
  $region48: #{mlp_forward.1} parent=0 // pred_region
    _
  $region49: #{mlp_forward.1} parent=0 // pred_fallthru
    _
  // Predicated region
  $region50: #{mlp_forward.1} parent=0 // pred_check
    _
  $region51: #{mlp_forward.1} parent=0 // pred_check_branch
    %43 = sbr.rel (0) target = $region53
  $region52: #{mlp_forward.1} parent=0 // pred_region
    _
  $region53: #{mlp_forward.1} parent=0 // pred_fallthru
    _
  %v44 = vld [vmem:[%s0] sm:$0xff]
  %v45 = vld [vmem:[%s1] sm:$0xff]
  %v46 = vld [vmem:[%s2] sm:$0x1]
  %v48 = vperm.slane %v46, 0
  %vm50 = vcmask 64512
  %v52 = vsel %vm50, %v44, 0
  %54 = vmatpush.msra.mxu0 0.0
  %55 = vmatpush.msra.mxu0 0.0
  %56 = vmatpush.msra.mxu0 0.0
  %57 = vmatpush.msra.mxu0 0.0
  %58 = vmatpush.msra.mxu0 0.0
  %59 = vmatpush.msra.mxu0 0.0
  %60 = vmatpush.msra.mxu0 0.0
  %61 = vmatpush.msra.mxu0 0.0
  %62 = vmatpush.msra.mxu0 0.0
  %63 = vmatpush.msra.mxu0 0.0
  %64 = vmatpush.msra.mxu0 0.0
  %65 = vmatpush.msra.mxu0 0.0
  %66 = vmatpush.msra.mxu0 0.0
  %67 = vmatpush.msra.mxu0 0.0
  %68 = vmatpush.msra.mxu0 0.0
  %69 = vmatpush.msra.mxu0 %v45
  %70 = vmatmul.f32.gmra.mxu0 %v52
  %v71 = vpop.f32.mrf.mxu0
  %v72 = vadd.f32 %v48, %v71
  %73 = vdwg.mxu0
  %v74 = vmax.f32 %v72, 0.0
  %v75 = vld [vmem:[%s3] sm:$0xff]
  %v76 = vld [vmem:[%s3 + $0x8] sm:$0xff]
  %v77 = vld [vmem:[%s3 + $0x10] sm:$0xff]
  %v78 = vld [vmem:[%s3 + $0x18] sm:$0xff]
  %v79 = vld [vmem:[%s3 + $0x20] sm:$0xff]
  %v80 = vld [vmem:[%s3 + $0x28] sm:$0xff]
  %v81 = vld [vmem:[%s3 + $0x30] sm:$0xff]
  %v82 = vld [vmem:[%s3 + $0x38] sm:$0xff]
  %v83 = vld [vmem:[%s3 + $0x40] sm:$0xff]
  %v84 = vld [vmem:[%s3 + $0x48] sm:$0xff]
  %v85 = vld [vmem:[%s3 + $0x50] sm:$0xff]
  %v86 = vld [vmem:[%s3 + $0x58] sm:$0xff]
  %v87 = vld [vmem:[%s3 + $0x60] sm:$0xff]
  %v88 = vld [vmem:[%s3 + $0x68] sm:$0xff]
  %v89 = vld [vmem:[%s3 + $0x70] sm:$0xff]
  %v90 = vld [vmem:[%s3 + $0x78] sm:$0xff]
  %v91 = vld [vmem:[%s4] sm:$0x1]
  %v93 = vperm.slane %v91, 0
  %95 = vmatpush.msra.mxu0 %v90
  %96 = vmatpush.msra.mxu0 %v89
  %97 = vmatpush.msra.mxu0 %v88
  %98 = vmatpush.msra.mxu0 %v87
  %99 = vmatpush.msra.mxu0 %v86
  %100 = vmatpush.msra.mxu0 %v85
  %101 = vmatpush.msra.mxu0 %v84
  %102 = vmatpush.msra.mxu0 %v83
  %103 = vmatpush.msra.mxu0 %v82
  %104 = vmatpush.msra.mxu0 %v81
  %105 = vmatpush.msra.mxu0 %v80
  %106 = vmatpush.msra.mxu0 %v79
  %107 = vmatpush.msra.mxu0 %v78
  %108 = vmatpush.msra.mxu0 %v77
  %109 = vmatpush.msra.mxu0 %v76
  %110 = vmatpush.msra.mxu0 %v75
  %111 = vmatmul.f32.gmra.mxu0 %v74
  %v112 = vpop.f32.mrf.mxu0
  %v113 = vadd.f32 %v93, %v112
  %114 = vdwg.mxu0
  %v115 = vmax.f32 %v113, 0.0
  %v116 = vld [vmem:[%s5] sm:$0xff]
  %v117 = vld [vmem:[%s5 + $0x8] sm:$0xff]
  %v118 = vld [vmem:[%s5 + $0x10] sm:$0xff]
  %v119 = vld [vmem:[%s5 + $0x18] sm:$0xff]
  %v120 = vld [vmem:[%s5 + $0x20] sm:$0xff]
  %v121 = vld [vmem:[%s5 + $0x28] sm:$0xff]
  %v122 = vld [vmem:[%s5 + $0x30] sm:$0xff]
  %v123 = vld [vmem:[%s5 + $0x38] sm:$0xff]
  %v124 = vld [vmem:[%s5 + $0x40] sm:$0xff]
  %v125 = vld [vmem:[%s5 + $0x48] sm:$0xff]
  %v126 = vld [vmem:[%s5 + $0x50] sm:$0xff]
  %v127 = vld [vmem:[%s5 + $0x58] sm:$0xff]
  %v128 = vld [vmem:[%s5 + $0x60] sm:$0xff]
  %v129 = vld [vmem:[%s5 + $0x68] sm:$0xff]
  %v130 = vld [vmem:[%s5 + $0x70] sm:$0xff]
  %v131 = vld [vmem:[%s5 + $0x78] sm:$0xff]
  %v132 = vld [vmem:[%s6] sm:$0x1]
  %v134 = vperm.slane %v132, 0
  %136 = vmatpush.msra.mxu0 %v131
  %137 = vmatpush.msra.mxu0 %v130
  %138 = vmatpush.msra.mxu0 %v129
  %139 = vmatpush.msra.mxu0 %v128
  %140 = vmatpush.msra.mxu0 %v127
  %141 = vmatpush.msra.mxu0 %v126
  %142 = vmatpush.msra.mxu0 %v125
  %143 = vmatpush.msra.mxu0 %v124
  %144 = vmatpush.msra.mxu0 %v123
  %145 = vmatpush.msra.mxu0 %v122
  %146 = vmatpush.msra.mxu0 %v121
  %147 = vmatpush.msra.mxu0 %v120
  %148 = vmatpush.msra.mxu0 %v119
  %149 = vmatpush.msra.mxu0 %v118
  %150 = vmatpush.msra.mxu0 %v117
  %151 = vmatpush.msra.mxu0 %v116
  %152 = vmatmul.f32.gmra.mxu0 %v115
  %v153 = vpop.f32.mrf.mxu0
  %v154 = vadd.f32 %v134, %v153
  %155 = vdwg.mxu0
  %v156 = vmax.f32 %v154, 0.0
  %v157 = vld [vmem:[%s7] sm:$0xff]
  %v158 = vld [vmem:[%s7 + $0x8] sm:$0xff]
  %v159 = vld [vmem:[%s7 + $0x10] sm:$0xff]
  %v160 = vld [vmem:[%s7 + $0x18] sm:$0xff]
  %v161 = vld [vmem:[%s7 + $0x20] sm:$0xff]
  %v162 = vld [vmem:[%s7 + $0x28] sm:$0xff]
  %v163 = vld [vmem:[%s7 + $0x30] sm:$0xff]
  %v164 = vld [vmem:[%s7 + $0x38] sm:$0xff]
  %v165 = vld [vmem:[%s7 + $0x40] sm:$0xff]
  %v166 = vld [vmem:[%s7 + $0x48] sm:$0xff]
  %v167 = vld [vmem:[%s7 + $0x50] sm:$0xff]
  %v168 = vld [vmem:[%s7 + $0x58] sm:$0xff]
  %v169 = vld [vmem:[%s7 + $0x60] sm:$0xff]
  %v170 = vld [vmem:[%s7 + $0x68] sm:$0xff]
  %v171 = vld [vmem:[%s7 + $0x70] sm:$0xff]
  %v172 = vld [vmem:[%s7 + $0x78] sm:$0xff]
  %v173 = vld [vmem:[%s8] sm:$0x1]
  %v175 = vperm.slane %v173, 0
  %177 = vmatpush.msra.mxu0 %v172
  %178 = vmatpush.msra.mxu0 %v171
  %179 = vmatpush.msra.mxu0 %v170
  %180 = vmatpush.msra.mxu0 %v169
  %181 = vmatpush.msra.mxu0 %v168
  %182 = vmatpush.msra.mxu0 %v167
  %183 = vmatpush.msra.mxu0 %v166
  %184 = vmatpush.msra.mxu0 %v165
  %185 = vmatpush.msra.mxu0 %v164
  %186 = vmatpush.msra.mxu0 %v163
  %187 = vmatpush.msra.mxu0 %v162
  %188 = vmatpush.msra.mxu0 %v161
  %189 = vmatpush.msra.mxu0 %v160
  %190 = vmatpush.msra.mxu0 %v159
  %191 = vmatpush.msra.mxu0 %v158
  %192 = vmatpush.msra.mxu0 %v157
  %193 = vmatmul.f32.gmra.mxu0 %v156
  %v194 = vpop.f32.mrf.mxu0
  %v195 = vadd.f32 %v175, %v194
  %196 = vdwg.mxu0
  %v197 = vmax.f32 %v195, 0.0
  %v198 = vld [vmem:[%s9] sm:$0xff]
  %v199 = vld [vmem:[%s9 + $0x8] sm:$0xff]
  %v200 = vld [vmem:[%s9 + $0x10] sm:$0xff]
  %v201 = vld [vmem:[%s9 + $0x18] sm:$0xff]
  %v202 = vld [vmem:[%s9 + $0x20] sm:$0xff]
  %v203 = vld [vmem:[%s9 + $0x28] sm:$0xff]
  %v204 = vld [vmem:[%s9 + $0x30] sm:$0xff]
  %v205 = vld [vmem:[%s9 + $0x38] sm:$0xff]
  %v206 = vld [vmem:[%s9 + $0x40] sm:$0xff]
  %v207 = vld [vmem:[%s9 + $0x48] sm:$0xff]
  %v208 = vld [vmem:[%s9 + $0x50] sm:$0xff]
  %v209 = vld [vmem:[%s9 + $0x58] sm:$0xff]
  %v210 = vld [vmem:[%s9 + $0x60] sm:$0xff]
  %v211 = vld [vmem:[%s9 + $0x68] sm:$0xff]
  %v212 = vld [vmem:[%s9 + $0x70] sm:$0xff]
  %v213 = vld [vmem:[%s9 + $0x78] sm:$0xff]
  %v214 = vld [vmem:[%s10] sm:$0x1]
  %v216 = vperm.slane %v214, 0
  %218 = vmatpush.msra.mxu0 %v213
  %219 = vmatpush.msra.mxu0 %v212
  %220 = vmatpush.msra.mxu0 %v211
  %221 = vmatpush.msra.mxu0 %v210
  %222 = vmatpush.msra.mxu0 %v209
  %223 = vmatpush.msra.mxu0 %v208
  %224 = vmatpush.msra.mxu0 %v207
  %225 = vmatpush.msra.mxu0 %v206
  %226 = vmatpush.msra.mxu0 %v205
  %227 = vmatpush.msra.mxu0 %v204
  %228 = vmatpush.msra.mxu0 %v203
  %229 = vmatpush.msra.mxu0 %v202
  %230 = vmatpush.msra.mxu0 %v201
  %231 = vmatpush.msra.mxu0 %v200
  %232 = vmatpush.msra.mxu0 %v199
  %233 = vmatpush.msra.mxu0 %v198
  %234 = vmatmul.f32.gmra.mxu0 %v197
  %v235 = vpop.f32.mrf.mxu0
  %v236 = vadd.f32 %v216, %v235
  %237 = vdwg.mxu0
  %v238 = vmax.f32 %v236, 0.0
  %v239 = vld [vmem:[%s11] sm:$0xff]
  %v240 = vld [vmem:[%s11 + $0x8] sm:$0xff]
  %v241 = vld [vmem:[%s11 + $0x10] sm:$0xff]
  %v242 = vld [vmem:[%s11 + $0x18] sm:$0xff]
  %v243 = vld [vmem:[%s11 + $0x20] sm:$0xff]
  %v244 = vld [vmem:[%s11 + $0x28] sm:$0xff]
  %v245 = vld [vmem:[%s11 + $0x30] sm:$0xff]
  %v246 = vld [vmem:[%s11 + $0x38] sm:$0xff]
  %v247 = vld [vmem:[%s11 + $0x40] sm:$0xff]
  %v248 = vld [vmem:[%s11 + $0x48] sm:$0xff]
  %v249 = vld [vmem:[%s11 + $0x50] sm:$0xff]
  %v250 = vld [vmem:[%s11 + $0x58] sm:$0xff]
  %v251 = vld [vmem:[%s11 + $0x60] sm:$0xff]
  %v252 = vld [vmem:[%s11 + $0x68] sm:$0xff]
  %v253 = vld [vmem:[%s11 + $0x70] sm:$0xff]
  %v254 = vld [vmem:[%s11 + $0x78] sm:$0xff]
  %v255 = vld [vmem:[%s12] sm:$0x1]
  %v257 = vperm.slane %v255, 0
  %259 = vmatpush.msra.mxu0 %v254
  %260 = vmatpush.msra.mxu0 %v253
  %261 = vmatpush.msra.mxu0 %v252
  %262 = vmatpush.msra.mxu0 %v251
  %263 = vmatpush.msra.mxu0 %v250
  %264 = vmatpush.msra.mxu0 %v249
  %265 = vmatpush.msra.mxu0 %v248
  %266 = vmatpush.msra.mxu0 %v247
  %267 = vmatpush.msra.mxu0 %v246
  %268 = vmatpush.msra.mxu0 %v245
  %269 = vmatpush.msra.mxu0 %v244
  %270 = vmatpush.msra.mxu0 %v243
  %271 = vmatpush.msra.mxu0 %v242
  %272 = vmatpush.msra.mxu0 %v241
  %273 = vmatpush.msra.mxu0 %v240
  %274 = vmatpush.msra.mxu0 %v239
  %275 = vmatmul.f32.gmra.mxu0 %v238
  %v276 = vpop.f32.mrf.mxu0
  %v277 = vadd.f32 %v257, %v276
  %278 = vdwg.mxu0
  %279 = vst [vmem:[%s13] sm:$0xff] %v277
  // Predicated region
  $region54: #{mlp_forward.1} parent=0 // pred_check
    _
  $region55: #{mlp_forward.1} parent=0 // pred_check_branch
    %281 = sbr.rel (0) target = $region57
  $region56: #{mlp_forward.1} parent=0 // pred_region
    _
  $region57: #{mlp_forward.1} parent=0 // pred_fallthru
    _
  // Predicated region
  $region58: #{mlp_forward.1} parent=0 // pred_check
    _
  $region59: #{mlp_forward.1} parent=0 // pred_check_branch
    %283 = sbr.rel (0) target = $region61
  $region60: #{mlp_forward.1} parent=0 // pred_region
    _
  $region61: #{mlp_forward.1} parent=0 // pred_fallthru
    _

</llo_original>
